<compile_context>
chip_gen: v7x
topology: tpu7x:2x2x1
jax: 0.10.0
libtpu: 0.0.40
codegen_flags: <defaults>
</compile_context>

<pallas_src>
import jax
import jax.numpy as jnp
from jax.experimental import pallas as pl
from jax.experimental.pallas import tpu as pltpu

EPS = 1e-6


def _normalize(x):
    """LayerNorm core (no affine): (x - mean) / (unbiased_std + eps), in f32."""
    d = x.shape[-1]
    mean = jnp.mean(x, axis=-1, keepdims=True)
    centered = x - mean
    var_unbiased = jnp.sum(centered * centered, axis=-1, keepdims=True) * (
        1.0 / (d - 1))
    inv = 1.0 / (jnp.sqrt(var_unbiased) + EPS)   # exact; tiny (tm, 1) tensor
    return centered * inv


def _sublayer_connection_kernel(x_ref, w_ref, b_ref, o_ref, *scratch):
    """out = x + normalize(x) @ w' + b' for one (row tile, column tile)."""
    if not scratch:
        # Resident-weight path: full (D, D) bf16 weight lives in VMEM, one
        # column tile per row tile -> LayerNorm + MXU + residual fully fused.
        x = x_ref[...].astype(jnp.float32)                       # (tm, D)
        xn = _normalize(x)
        y = jnp.dot(xn.astype(jnp.bfloat16), w_ref[...],
                    preferred_element_type=jnp.float32)          # MXU, f32 acc
        o_ref[...] = (x + y + b_ref[...].astype(jnp.float32)).astype(o_ref.dtype)
        return

    # Streamed-weight path (large D): LayerNorm once per row tile (j == 0),
    # stash xn (bf16) + residual x columns in VMEM, one MXU pass per
    # weight-column tile streamed from HBM.
    xn_ref, xcol_ref = scratch
    j = pl.program_id(1)
    tn = o_ref.shape[-1]
    num_n = x_ref.shape[-1] // tn

    @pl.when(j == 0)
    def _():
        x = x_ref[...].astype(jnp.float32)
        xn_ref[...] = _normalize(x).astype(jnp.bfloat16)
        for kk in range(num_n):                       # static unroll: avoids
            xcol_ref[kk] = x[:, kk * tn:(kk + 1) * tn]  # dynamic lane slicing

    y = jnp.dot(xn_ref[...], w_ref[...], preferred_element_type=jnp.float32)
    o_ref[...] = (xcol_ref[j] + y + b_ref[...].astype(jnp.float32)).astype(
        o_ref.dtype)


def _round_up(n, m):
    return ((n + m - 1) // m) * m


def _choose_tiles(M, D):
    """Pick (tm, tn).  tn == D keeps the bf16 weight resident in VMEM."""
    if D <= 2048:                         # bf16 weight <= 8 MiB -> resident
        tn = D
        base_tm = 512 if D < 2048 else 256
    else:                                 # stream weight column tiles
        base_tm = 256
        tn = next((t for t in (512, 256, 128) if D % t == 0), D)
        # TODO(synk): pad D for streaming when it is not a multiple of 128.
    tm = min(base_tm, _round_up(M, 8))
    if tm >= 256:
        tm = (tm // 256) * 256            # full 2x256 MXU passes (v6e/v7x)
    else:
        tm = max(8, (tm // 8) * 8)        # f32 sublane alignment
    return tm, tn


def sublayer_connection(x, w, b, gamma, beta, *, tm=None, tn=None):
    """x: [B, S, D]; w: [D, D]; b, gamma, beta: [D].  Returns x-dtype [B,S,D]."""
    B, S, D = x.shape
    M = B * S
    in_itemsize = jnp.dtype(x.dtype).itemsize

    auto_tm, auto_tn = _choose_tiles(M, D)
    tm = auto_tm if tm is None else tm
    tn = auto_tn if tn is None else tn

    num_m = pl.cdiv(M, tm)
    num_n = D // tn
    M_pad = num_m * tm
    streamed = num_n > 1

    x2 = x.reshape(M, D)
    if M_pad != M:
        # Padded zero rows: std == 0 -> inv == 1/EPS but xn stays 0, so no
        # NaNs; the padded rows are sliced away below.
        x2 = jnp.pad(x2, ((0, M_pad - M), (0, 0)))

    # Fold LayerNorm affine into the Linear (f32 math, single bf16 rounding):
    #   (gamma*z + beta) @ w + b == z @ (gamma[:,None]*w) + (beta @ w + b)
    wf = w.astype(jnp.float32)
    w_folded = (gamma.astype(jnp.float32)[:, None] * wf).astype(jnp.bfloat16)
    b_folded = (beta.astype(jnp.float32) @ wf
                + b.astype(jnp.float32)).reshape(1, D)

    # ---- explicit VMEM budget (scoped default is well below physical) ----
    vmem_bytes = (
        2 * tm * D * in_itemsize                  # x row tiles (double-buffered)
        + 2 * tm * tn * in_itemsize               # out tiles (double-buffered)
        + 2 * D * tn * 2                          # bf16 weight tiles (worst case)
        + 4 * tn * 4                              # bias tiles
        + 4 * tm * D * 4                          # in-kernel f32 temporaries
        + ((tm * D * 2 + tm * D * 4) if streamed else 0)   # xn + x-col scratch
        + (4 << 20)                               # compiler headroom
    )
    try:                                          # generation-aware physical cap
        vmem_cap = int(pltpu.get_tpu_info().vmem_capacity_bytes)
    except Exception:
        vmem_cap = 64 << 20                       # conservative (v7x per-TC)
    vmem_limit = int(min(max(vmem_bytes, 32 << 20), vmem_cap - (4 << 20)))

    cost = pl.CostEstimate(
        flops=2 * M_pad * D * D,
        transcendentals=2 * M_pad,                # sqrt + reciprocal per row
        bytes_accessed=(2 * M_pad * D * in_itemsize               # x + out
                        + (num_m if streamed else 1) * D * D * 2  # bf16 weight
                        + D * 4))

    scratch_shapes = []
    if streamed:
        scratch_shapes = [
            pltpu.VMEM((tm, D), jnp.bfloat16),            # normalized x
            pltpu.VMEM((num_n, tm, tn), jnp.float32),     # residual x columns
        ]

    out_shape = jax.ShapeDtypeStruct((M_pad, D), x.dtype)

    def build(single_buffer_invariants):
        # Grid-invariant weight/bias (resident path) only need one buffer;
        # streamed weight tiles keep default double buffering.
        pm = (pl.Buffered(1)
              if (single_buffer_invariants and not streamed) else None)
        if pm is not None:
            w_spec = pl.BlockSpec((D, tn), lambda i, j: (0, j), pipeline_mode=pm)
            b_spec = pl.BlockSpec((1, tn), lambda i, j: (0, j), pipeline_mode=pm)
        else:
            w_spec = pl.BlockSpec((D, tn), lambda i, j: (0, j))
            b_spec = pl.BlockSpec((1, tn), lambda i, j: (0, j))
        return pl.pallas_call(
            _sublayer_connection_kernel,
            out_shape=out_shape,
            grid_spec=pltpu.PrefetchScalarGridSpec(
                num_scalar_prefetch=0,
                grid=(num_m, num_n),
                in_specs=[
                    pl.BlockSpec((tm, D), lambda i, j: (i, 0)),   # x row tile
                    w_spec,                                       # bf16 weight
                    b_spec,                                       # folded bias
                ],
                out_specs=pl.BlockSpec((tm, tn), lambda i, j: (i, j)),
                scratch_shapes=scratch_shapes,
            ),
            compiler_params=pltpu.CompilerParams(
                dimension_semantics=("parallel", "arbitrary"),
                vmem_limit_bytes=vmem_limit,
            ),
            cost_estimate=cost,
        )

    try:
        out = build(True)(x2, w_folded, b_folded)
    except Exception:
        # pl.Buffered(1) hint unsupported on this jax version -> default
        # double buffering (identical results, slightly more VMEM).
        out = build(False)(x2, w_folded, b_folded)

    if M_pad != M:
        out = out[:M]
    return out.reshape(B, S, D)


def _reference(x, w, b, gamma, beta):
    """Pure-JAX f32 reference mirroring the PyTorch forward."""
    xf = x.astype(jnp.float32)
    mean = jnp.mean(xf, axis=-1, keepdims=True)
    var = jnp.sum((xf - mean) ** 2, axis=-1, keepdims=True) / (xf.shape[-1] - 1)
    std = jnp.sqrt(var)
    xn = gamma * (xf - mean) / (std + EPS) + beta
    y = xn @ w + b
    return (xf + y).astype(x.dtype)


if __name__ == "__main__":
    key = jax.random.PRNGKey(0)
    k_x, k_w, k_b, k_g, k_be, k_x2, k_w2, k_b2 = jax.random.split(key, 8)

    # --- 1) resident-weight path (the shape the module implies) ---
    B, S, D = 2, 8, 32   # batch, seq, hidden(size)
    x = jax.random.normal(k_x, (B, S, D), dtype=jnp.float32)
    # LayerNorm params init to ones/zeros; perturb them so the gamma/beta
    # folding is actually exercised (they are learnable parameters).
    gamma = 1.0 + 0.1 * jax.random.normal(k_g, (D,), dtype=jnp.float32)
    beta = 0.05 * jax.random.normal(k_be, (D,), dtype=jnp.float32)
    # Deterministic synthetic sublayer = Linear(size, size).
    w = jax.random.normal(k_w, (D, D), dtype=jnp.float32) * (1.0 / jnp.sqrt(D))
    b = jax.random.normal(k_b, (D,), dtype=jnp.float32) * 0.01

    out = jax.block_until_ready(sublayer_connection(x, w, b, gamma, beta))
    ref = _reference(x, w, b, gamma, beta)
    assert out.shape == (B, S, D)
    assert jnp.allclose(out, ref, atol=3e-2, rtol=3e-2), (
        float(jnp.max(jnp.abs(out - ref))))

    # --- 2) streamed weight-column path (what large D uses), small & fast ---
    D2 = 256
    x_s = jax.random.normal(k_x2, (B, S, D2), dtype=jnp.float32)
    gamma_s = jnp.ones((D2,), dtype=jnp.float32)
    beta_s = jnp.zeros((D2,), dtype=jnp.float32)
    w_s = jax.random.normal(k_w2, (D2, D2), dtype=jnp.float32) * (
        1.0 / jnp.sqrt(D2))
    b_s = jax.random.normal(k_b2, (D2,), dtype=jnp.float32) * 0.01

    out_s = jax.block_until_ready(
        sublayer_connection(x_s, w_s, b_s, gamma_s, beta_s, tm=8, tn=128))
    ref_s = _reference(x_s, w_s, b_s, gamma_s, beta_s)
    assert out_s.shape == (B, S, D2)
    assert jnp.allclose(out_s, ref_s, atol=3e-2, rtol=3e-2), (
        float(jnp.max(jnp.abs(out_s - ref_s))))

    print("KERNEL_OK")
</pallas_src>

<mosaic_0001>
module attributes {stable_mosaic.version = 11 : i64} {
  func.func @_sublayer_connection_kernel(%arg0: i32, %arg1: i32, %arg2: memref<16x32xf32, #tpu.memory_space<vmem>>, %arg3: memref<32x32xbf16, #tpu.memory_space<vmem>>, %arg4: memref<1x32xf32, #tpu.memory_space<vmem>>, %arg5: memref<16x32xf32, #tpu.memory_space<vmem>>) attributes {dimension_semantics = [#tpu.dimension_semantics<parallel>, #tpu.dimension_semantics<arbitrary>], iteration_bounds = array<i64: 1, 1>, scalar_prefetch = 0 : i64, scratch_operands = 0 : i64, tpu.core_type = #tpu.core_type<tc>, window_params = [{transform_indices = @transform_0, window_bounds = array<i64: 16, 32>}, {pipeline_mode = #tpu.pipeline_mode<synchronous>, transform_indices = @transform_1, window_bounds = array<i64: 32, 32>}, {pipeline_mode = #tpu.pipeline_mode<synchronous>, transform_indices = @transform_2, window_bounds = array<i64: 1, 32>}, {transform_indices = @transform_3, window_bounds = array<i64: 16, 32>}]} {
    %c0 = arith.constant 0 : index
    %c0_0 = arith.constant 0 : index
    %0 = vector.load %arg2[%c0, %c0_0] : memref<16x32xf32, #tpu.memory_space<vmem>>, vector<16x32xf32>
    %cst = arith.constant dense<0.000000e+00> : vector<16xf32>
    %1 = vector.multi_reduction <add>, %0, %cst [1] : vector<16x32xf32> to vector<16xf32>
    %2 = vector.shape_cast %1 : vector<16xf32> to vector<16x1xf32>
    %cst_1 = arith.constant 3.200000e+01 : f32
    %3 = vector.broadcast %cst_1 : f32 to vector<16x1xf32>
    %4 = arith.divf %2, %3 : vector<16x1xf32>
    %5 = vector.broadcast %4 : vector<16x1xf32> to vector<16x32xf32>
    %6 = arith.subf %0, %5 : vector<16x32xf32>
    %7 = arith.mulf %6, %6 : vector<16x32xf32>
    %cst_2 = arith.constant dense<0.000000e+00> : vector<16xf32>
    %8 = vector.multi_reduction <add>, %7, %cst_2 [1] : vector<16x32xf32> to vector<16xf32>
    %9 = vector.shape_cast %8 : vector<16xf32> to vector<16x1xf32>
    %cst_3 = arith.constant 0.0322580636 : f32
    %10 = vector.broadcast %cst_3 : f32 to vector<16x1xf32>
    %11 = arith.mulf %9, %10 : vector<16x1xf32>
    %12 = math.sqrt %11 : vector<16x1xf32>
    %cst_4 = arith.constant 9.99999997E-7 : f32
    %13 = vector.broadcast %cst_4 : f32 to vector<16x1xf32>
    %14 = arith.addf %12, %13 : vector<16x1xf32>
    %cst_5 = arith.constant 1.000000e+00 : f32
    %15 = vector.broadcast %cst_5 : f32 to vector<16x1xf32>
    %16 = arith.divf %15, %14 : vector<16x1xf32>
    %17 = vector.broadcast %16 : vector<16x1xf32> to vector<16x32xf32>
    %18 = arith.mulf %6, %17 : vector<16x32xf32>
    %19 = arith.truncf %18 : vector<16x32xf32> to vector<16x32xbf16>
    %c0_6 = arith.constant 0 : index
    %c0_7 = arith.constant 0 : index
    %20 = vector.load %arg3[%c0_6, %c0_7] : memref<32x32xbf16, #tpu.memory_space<vmem>>, vector<32x32xbf16>
    %cst_8 = arith.constant dense<0.000000e+00> : vector<16x32xf32>
    %21 = tpu.matmul %19, %20, %cst_8 {dimension_numbers = #tpu.dot_dimension_numbers<[1], [0], [0], [1], [0, 0, 1, 1], [], []>} : vector<16x32xbf16>, vector<32x32xbf16>, vector<16x32xf32> -> vector<16x32xf32>
    %22 = arith.addf %0, %21 : vector<16x32xf32>
    %c0_9 = arith.constant 0 : index
    %c0_10 = arith.constant 0 : index
    %23 = vector.load %arg4[%c0_9, %c0_10] : memref<1x32xf32, #tpu.memory_space<vmem>>, vector<1x32xf32>
    %24 = vector.broadcast %23 : vector<1x32xf32> to vector<16x32xf32>
    %25 = arith.addf %22, %24 : vector<16x32xf32>
    %c0_11 = arith.constant 0 : index
    %c0_12 = arith.constant 0 : index
    %26 = vector.load %arg5[%c0_11, %c0_12] : memref<16x32xf32, #tpu.memory_space<vmem>>, vector<16x32xf32>
    tpu.vector_store %arg5[%c0_11, %c0_12], %25 {strides = array<i32>} : memref<16x32xf32, #tpu.memory_space<vmem>>, vector<16x32xf32>,
    return
  }
  func.func @transform_0(%arg0: i32, %arg1: i32) -> (i32, i32) {
    %c0_i32 = arith.constant 0 : i32
    %c0_i32_0 = arith.constant 0 : i32
    return %arg0, %c0_i32 : i32, i32
  }
  func.func @transform_1(%arg0: i32, %arg1: i32) -> (i32, i32) {
    %c0_i32 = arith.constant 0 : i32
    %c0_i32_0 = arith.constant 0 : i32
    return %c0_i32, %arg1 : i32, i32
  }
  func.func @transform_2(%arg0: i32, %arg1: i32) -> (i32, i32) {
    %c0_i32 = arith.constant 0 : i32
    %c0_i32_0 = arith.constant 0 : i32
    return %c0_i32, %arg1 : i32, i32
  }
  func.func @transform_3(%arg0: i32, %arg1: i32) -> (i32, i32) {
    %c0_i32 = arith.constant 0 : i32
    return %arg0, %arg1 : i32, i32
  }
}

module attributes {stable_mosaic.version = 11 : i64} {
  func.func @_sublayer_connection_kernel(%arg0: i32, %arg1: i32, %arg2: memref<16x32xf32, #tpu.memory_space<vmem>>, %arg3: memref<32x32xbf16, #tpu.memory_space<vmem>>, %arg4: memref<1x32xf32, #tpu.memory_space<vmem>>, %arg5: memref<16x32xf32, #tpu.memory_space<vmem>>) attributes {dimension_semantics = [#tpu.dimension_semantics<parallel>, #tpu.dimension_semantics<arbitrary>], iteration_bounds = array<i64: 1, 1>, scalar_prefetch = 0 : i64, scratch_operands = 0 : i64, tpu.core_type = #tpu.core_type<tc>, window_params = [{transform_indices = @transform_0, window_bounds = array<i64: 16, 32>}, {transform_indices = @transform_1, window_bounds = array<i64: 32, 32>}, {transform_indices = @transform_2, window_bounds = array<i64: 1, 32>}, {transform_indices = @transform_3, window_bounds = array<i64: 16, 32>}]} {
    %c0 = arith.constant 0 : index
    %c0_0 = arith.constant 0 : index
    %0 = vector.load %arg2[%c0, %c0_0] : memref<16x32xf32, #tpu.memory_space<vmem>>, vector<16x32xf32>
    %cst = arith.constant dense<0.000000e+00> : vector<16xf32>
    %1 = vector.multi_reduction <add>, %0, %cst [1] : vector<16x32xf32> to vector<16xf32>
    %2 = vector.shape_cast %1 : vector<16xf32> to vector<16x1xf32>
    %cst_1 = arith.constant 3.200000e+01 : f32
    %3 = vector.broadcast %cst_1 : f32 to vector<16x1xf32>
    %4 = arith.divf %2, %3 : vector<16x1xf32>
    %5 = vector.broadcast %4 : vector<16x1xf32> to vector<16x32xf32>
    %6 = arith.subf %0, %5 : vector<16x32xf32>
    %7 = arith.mulf %6, %6 : vector<16x32xf32>
    %cst_2 = arith.constant dense<0.000000e+00> : vector<16xf32>
    %8 = vector.multi_reduction <add>, %7, %cst_2 [1] : vector<16x32xf32> to vector<16xf32>
    %9 = vector.shape_cast %8 : vector<16xf32> to vector<16x1xf32>
    %cst_3 = arith.constant 0.0322580636 : f32
    %10 = vector.broadcast %cst_3 : f32 to vector<16x1xf32>
    %11 = arith.mulf %9, %10 : vector<16x1xf32>
    %12 = math.sqrt %11 : vector<16x1xf32>
    %cst_4 = arith.constant 9.99999997E-7 : f32
    %13 = vector.broadcast %cst_4 : f32 to vector<16x1xf32>
    %14 = arith.addf %12, %13 : vector<16x1xf32>
    %cst_5 = arith.constant 1.000000e+00 : f32
    %15 = vector.broadcast %cst_5 : f32 to vector<16x1xf32>
    %16 = arith.divf %15, %14 : vector<16x1xf32>
    %17 = vector.broadcast %16 : vector<16x1xf32> to vector<16x32xf32>
    %18 = arith.mulf %6, %17 : vector<16x32xf32>
    %19 = arith.truncf %18 : vector<16x32xf32> to vector<16x32xbf16>
    %c0_6 = arith.constant 0 : index
    %c0_7 = arith.constant 0 : index
    %20 = vector.load %arg3[%c0_6, %c0_7] : memref<32x32xbf16, #tpu.memory_space<vmem>>, vector<32x32xbf16>
    %cst_8 = arith.constant dense<0.000000e+00> : vector<16x32xf32>
    %21 = tpu.matmul %19, %20, %cst_8 {dimension_numbers = #tpu.dot_dimension_numbers<[1], [0], [0], [1], [0, 0, 1, 1], [], []>} : vector<16x32xbf16>, vector<32x32xbf16>, vector<16x32xf32> -> vector<16x32xf32>
    %22 = arith.addf %0, %21 : vector<16x32xf32>
    %c0_9 = arith.constant 0 : index
    %c0_10 = arith.constant 0 : index
    %23 = vector.load %arg4[%c0_9, %c0_10] : memref<1x32xf32, #tpu.memory_space<vmem>>, vector<1x32xf32>
    %24 = vector.broadcast %23 : vector<1x32xf32> to vector<16x32xf32>
    %25 = arith.addf %22, %24 : vector<16x32xf32>
    %c0_11 = arith.constant 0 : index
    %c0_12 = arith.constant 0 : index
    %26 = vector.load %arg5[%c0_11, %c0_12] : memref<16x32xf32, #tpu.memory_space<vmem>>, vector<16x32xf32>
    tpu.vector_store %arg5[%c0_11, %c0_12], %25 {strides = array<i32>} : memref<16x32xf32, #tpu.memory_space<vmem>>, vector<16x32xf32>,
    return
  }
  func.func @transform_0(%arg0: i32, %arg1: i32) -> (i32, i32) {
    %c0_i32 = arith.constant 0 : i32
    %c0_i32_0 = arith.constant 0 : i32
    return %arg0, %c0_i32 : i32, i32
  }
  func.func @transform_1(%arg0: i32, %arg1: i32) -> (i32, i32) {
    %c0_i32 = arith.constant 0 : i32
    %c0_i32_0 = arith.constant 0 : i32
    return %c0_i32, %arg1 : i32, i32
  }
  func.func @transform_2(%arg0: i32, %arg1: i32) -> (i32, i32) {
    %c0_i32 = arith.constant 0 : i32
    %c0_i32_0 = arith.constant 0 : i32
    return %c0_i32, %arg1 : i32, i32
  }
  func.func @transform_3(%arg0: i32, %arg1: i32) -> (i32, i32) {
    %c0_i32 = arith.constant 0 : i32
    return %arg0, %arg1 : i32, i32
  }
}

</mosaic_0001>

<llo_original>
// kernel: tpu_custom_call.1
$region0: #{tpu_custom_call.1}
  #allocation0 [shape = 'u32[]', space=smem, size = 0x4, offset = 0x4, fixed_abs, tag = 'smem constant byte address 0x4 - core index']
  #allocation1 [shape = 'u32[144,128]{1,0:T(1,128)}', space=vmem, size = 0x12000, scoped, tag = 'internal scratch']
  %s0 = inlined_call_operand.hbm [shape: f32[16,32], index: 0, kind: input, shape index: {}]
  %s1 = inlined_call_operand.hbm [shape: bf16[32,32], index: 1, kind: input, shape index: {}]
  %s2 = inlined_call_operand.vmem [shape: f32[1,32], index: 2, kind: input, shape index: {}]
  %s3 = inlined_call_operand.hbm [shape: f32[16,32], index: 3, kind: output, shape index: {}]
  %s4 = sld [smem:[#allocation0]]
  $region30: #{tpu_custom_call.1} parent=0
    _
  %s6 = ssub.s32 1, %s4
  %s7 = scalar_select 0, %s6, %s4
  $region1: #{tpu_custom_call.1} parent=0
    #allocation2 [shape = 'u8[8192]{0}', space=vmem, size = 0x2000, scoped, tag = 'input window, operand 0, single buffered']
    #allocation3 [shape = 's32[1]{0}', space=sflag, size = 0x4, scoped, tag = 'scoped memory for tpu_custom_call.1']
    #allocation4 [shape = 's32[1]{0}', space=sflag, size = 0x4, scoped, tag = 'scoped memory for tpu_custom_call.1']
    #allocation5 [shape = 'u8[8192]{0}', space=vmem, size = 0x2000, scoped, tag = 'input window, operand 1, single buffered']
    #allocation6 [shape = 's32[1]{0}', space=sflag, size = 0x4, scoped, tag = 'scoped memory for tpu_custom_call.1']
    #allocation7 [shape = 'u8[8192]{0}', space=vmem, size = 0x2000, scoped, tag = 'output window, operand 0, single buffered']
    %8 = vsyncpa [#allocation3], 0
    %9 = vsyncpa [#allocation6], 0
    %10 = vsyncpa [#allocation4], 0
    // Predicated region
    $region2: #{tpu_custom_call.1} parent=1 // pred_check
      _
    $region3: #{tpu_custom_call.1} parent=1 // pred_check_branch
      %12 = sbr.rel (0) target = $region5
    $region4: #{tpu_custom_call.1} parent=1 // pred_region
      %s14 = ssub.s32 256, 256
      %15 = vsyncadd [#allocation3], %s14
      %s16 = sshll.u32 [#allocation2], 4
      %s17 = int_to_ptr.vmem [resolvable:$true] %s16
      %22 = dma.hbm_to_vmem [thread:$0]  %s0, 256, %s17, [#allocation3], 128, 128, 8
    $region5: #{tpu_custom_call.1} parent=1 // pred_fallthru
      _
    // Predicated region
    $region6: #{tpu_custom_call.1} parent=1 // pred_check
      _
    $region7: #{tpu_custom_call.1} parent=1 // pred_check_branch
      %24 = sbr.rel (0) target = $region9
    $region8: #{tpu_custom_call.1} parent=1 // pred_region
      %s26 = ssub.s32 256, 256
      %27 = vsyncadd [#allocation6], %s26
      %s28 = sshll.u32 [#allocation5], 4
      %s29 = int_to_ptr.vmem [resolvable:$true] %s28
      %34 = dma.hbm_to_vmem [thread:$0]  %s1, 256, %s29, [#allocation6], 64, 64, 4
    $region9: #{tpu_custom_call.1} parent=1 // pred_fallthru
      _
    // Predicated region
    $region10: #{tpu_custom_call.1} parent=1 // pred_check
      _
    $region11: #{tpu_custom_call.1} parent=1 // pred_check_branch
      %36 = sbr.rel (0) target = $region13
    $region12: #{tpu_custom_call.1} parent=1 // pred_region
      _
    $region13: #{tpu_custom_call.1} parent=1 // pred_fallthru
      _
    // Predicated region
    $region14: #{tpu_custom_call.1} parent=1 // pred_check
      _
    $region15: #{tpu_custom_call.1} parent=1 // pred_check_branch
      %38 = sbr.rel (0) target = $region17
    $region16: #{tpu_custom_call.1} parent=1 // pred_region
      %39 = dma.done [#allocation3], 256
    $region17: #{tpu_custom_call.1} parent=1 // pred_fallthru
      _
    // Predicated region
    $region18: #{tpu_custom_call.1} parent=1 // pred_check
      _
    $region19: #{tpu_custom_call.1} parent=1 // pred_check_branch
      %41 = sbr.rel (0) target = $region21
    $region20: #{tpu_custom_call.1} parent=1 // pred_region
      %42 = dma.done [#allocation6], 256
    $region21: #{tpu_custom_call.1} parent=1 // pred_fallthru
      _
    %v44 = vld [vmem:[#allocation2] sm:$0xff]
    %v45 = vld [vmem:[#allocation2 + $0x8] sm:$0xff]
    %vm46 = vcmask 261120
    %v47 = vsel %vm46, %v44, 0.0
    %48 = vadd.xlane.f32.xlu0 %v47
    %v49 = vpop.xlane.xlu0 %48
    %v50 = vsel %vm46, %v45, 0.0
    %51 = vadd.xlane.f32.xlu0 %v50
    %v52 = vpop.xlane.xlu0 %51
    %v53 = vrcp.pop 32.0
    %v54 = vmul.f32 %v49, %v53
    %v55 = vmul.f32 %v52, %v53
    %v56 = vsub.f32 %v44, %v54
    %v57 = vsub.f32 %v45, %v55
    %v58 = vmul.f32 %v56, %v56
    %v59 = vmul.f32 %v57, %v57
    %v60 = vsel %vm46, %v58, 0.0
    %61 = vadd.xlane.f32.xlu0 %v60
    %v62 = vpop.xlane.xlu0 %61
    %v63 = vsel %vm46, %v59, 0.0
    %64 = vadd.xlane.f32.xlu0 %v63
    %v65 = vpop.xlane.xlu0 %64
    %v66 = vmul.f32 %v62, 0.032258064
    %v67 = vmul.f32 %v65, 0.032258064
    %v68 = vrsqrt.pop %v66
    %v69 = vmul.f32 %v66, %v68
    %vm70 = vcmp.eq.f32.partialorder %v66, inf
    %v71 = vsel %vm70, %v66, %v69
    %vm72 = vcmp.eq.f32.partialorder %v66, 0.0
    %v73 = vand.u32 %v66, 2147483648
    %v74 = vsel %vm72, %v73, %v71
    %v75 = vrsqrt.pop %v67
    %v76 = vmul.f32 %v67, %v75
    %vm77 = vcmp.eq.f32.partialorder %v67, inf
    %v78 = vsel %vm77, %v67, %v76
    %vm79 = vcmp.eq.f32.partialorder %v67, 0.0
    %v80 = vand.u32 %v67, 2147483648
    %v81 = vsel %vm79, %v80, %v78
    %v82 = vadd.f32 %v74, 1e-06
    %v83 = vadd.f32 %v81, 1e-06
    %v84 = vrcp.pop %v82
    %v85 = vmul.f32 1.0, %v84
    %v86 = vrcp.pop %v83
    %v87 = vmul.f32 1.0, %v86
    %v88 = vmul.f32 %v56, %v85
    %v89 = vmul.f32 %v57, %v87
    %v90 = vpack.c.bf16 %v89, %v88
    %v91 = vld [vmem:[#allocation5] sm:$0xf]
    %v92 = vld [vmem:[#allocation5 + $0x4] sm:$0xf]
    %v93 = vld [vmem:[#allocation5 + $0x8] sm:$0xf]
    %v94 = vld [vmem:[#allocation5 + $0xc] sm:$0xf]
    %v99 = vunpack.c.l.b16 %v91
    %v100 = vunpack.c.l.b16 %v92
    %v101 = vunpack.c.l.b16 %v93
    %v102 = vunpack.c.l.b16 %v94
    %v103 = vpack.c.b16 %v100, %v99
    %v104 = vpack.c.b16 %v102, %v101
    %v108 = vsel %vm46, %v90, 0
    %110 = vmatprep.subr.bf16.mxu0 0
    %111 = vmatpush1.bf16.msra.mxu0 %v103
    %112 = vmatprep.subr.bf16.mxu0 0
    %113 = vmatpush1.bf16.msra.mxu0 %v104
    %114 = vmatprep.subr.bf16.mxu0 0
    %115 = vmatpush1.bf16.msra.mxu0 0
    %116 = vmatprep.subr.bf16.mxu0 0
    %117 = vmatpush1.bf16.msra.mxu0 0
    %118 = vmatprep.subr.bf16.mxu0 0
    %119 = vmatpush1.bf16.msra.mxu0 0
    %120 = vmatprep.subr.bf16.mxu0 0
    %121 = vmatpush1.bf16.msra.mxu0 0
    %122 = vmatprep.subr.bf16.mxu0 0
    %123 = vmatpush1.bf16.msra.mxu0 0
    %124 = vmatprep.subr.bf16.mxu0 0
    %125 = vmatpush1.bf16.msra.mxu0 0
    %126 = vmatprep.subr.bf16.mxu0 0
    %127 = vmatpush1.bf16.msra.mxu0 0
    %128 = vmatprep.subr.bf16.mxu0 0
    %129 = vmatpush1.bf16.msra.mxu0 0
    %130 = vmatprep.subr.bf16.mxu0 0
    %131 = vmatpush1.bf16.msra.mxu0 0
    %132 = vmatprep.subr.bf16.mxu0 0
    %133 = vmatpush1.bf16.msra.mxu0 0
    %134 = vmatprep.subr.bf16.mxu0 0
    %135 = vmatpush1.bf16.msra.mxu0 0
    %136 = vmatprep.subr.bf16.mxu0 0
    %137 = vmatpush1.bf16.msra.mxu0 0
    %138 = vmatprep.subr.bf16.mxu0 0
    %139 = vmatpush1.bf16.msra.mxu0 0
    %140 = vmatprep.subr.bf16.mxu0 0
    %141 = vmatpush1.bf16.msra.mxu0 0
    %142 = vmatprep.mubr.bf16.mxu0 0
    %143 = vmatmul.mubr.bf16.gmra.mrb[0].mxu0 %v108
    %v144 = vpop.f32.mrb[0].mxu0
    %v145 = vadd.f32 0.0, %v144
    %v146 = vpop.f32.mrb[0].mxu0
    %v147 = vpop.f32.mrb[0].mxu0
    %v148 = vadd.f32 0.0, %v147
    %v149 = vpop.f32.mrb[0].mxu0
    %150 = vdwg.mxu0
    %v151 = vadd.f32 %v44, %v145
    %v152 = vadd.f32 %v45, %v148
    %v153 = vld [vmem:[%s2] sm:$0x1]
    %v155 = vlaneseq
    %v156 = vshrl.u32 %v155, 7
    %v157 = vsub.s32 0, %v156
    %v158 = vrot.slane %v153, %v157
    %v160 = vadd.f32 %v151, %v158
    %v161 = vadd.f32 %v152, %v158
    %162 = vst.msk [vmem:[#allocation7] sm:$0xff] %vm46, %v160
    %163 = vst.msk [vmem:[#allocation7 + $0x8] sm:$0xff] %vm46, %v161
    // Predicated region
    $region22: #{tpu_custom_call.1} parent=1 // pred_check
      _
    $region23: #{tpu_custom_call.1} parent=1 // pred_check_branch
      %165 = sbr.rel (0) target = $region25
    $region24: #{tpu_custom_call.1} parent=1 // pred_region
      %s167 = ssub.s32 256, 256
      %168 = vsyncadd [#allocation4], %s167
      %s169 = sshll.u32 [#allocation7], 4
      %s170 = int_to_ptr.vmem [resolvable:$true] %s169
      %175 = dma.vmem_to_hbm [thread:$0]  %s170, 256, %s3, [#allocation4], 128, 128, 8
    $region25: #{tpu_custom_call.1} parent=1 // pred_fallthru
      _
    // Predicated region
    $region26: #{tpu_custom_call.1} parent=1 // pred_check
      _
    $region27: #{tpu_custom_call.1} parent=1 // pred_check_branch
      %177 = sbr.rel (0) target = $region29
    $region28: #{tpu_custom_call.1} parent=1 // pred_region
      %178 = dma.done [#allocation4], 256
    $region29: #{tpu_custom_call.1} parent=1 // pred_fallthru
      _
    %179 = vsyncpa [#allocation3], 1
    %180 = vsyncpa [#allocation6], 1
    %181 = vsyncpa [#allocation4], 1

// kernel: tpu_custom_call.1
$region0: #{tpu_custom_call.1}
  #allocation0 [shape = 'u32[]', space=smem, size = 0x4, offset = 0x4, fixed_abs, tag = 'smem constant byte address 0x4 - core index']
  #allocation1 [shape = 'u32[144,128]{1,0:T(1,128)}', space=vmem, size = 0x12000, scoped, tag = 'internal scratch']
  %s0 = inlined_call_operand.hbm [shape: f32[16,32], index: 0, kind: input, shape index: {}]
  %s1 = inlined_call_operand.hbm [shape: bf16[32,32], index: 1, kind: input, shape index: {}]
  %s2 = inlined_call_operand.vmem [shape: f32[1,32], index: 2, kind: input, shape index: {}]
  %s3 = inlined_call_operand.hbm [shape: f32[16,32], index: 3, kind: output, shape index: {}]
  %s4 = sld [smem:[#allocation0]]
  $region30: #{tpu_custom_call.1} parent=0
    _
  %s6 = ssub.s32 1, %s4
  %s7 = scalar_select 0, %s6, %s4
  $region1: #{tpu_custom_call.1} parent=0
    #allocation2 [shape = 'u8[8192]{0}', space=vmem, size = 0x2000, scoped, tag = 'input window, operand 0, single buffered']
    #allocation3 [shape = 's32[1]{0}', space=sflag, size = 0x4, scoped, tag = 'scoped memory for tpu_custom_call.1']
    #allocation4 [shape = 's32[1]{0}', space=sflag, size = 0x4, scoped, tag = 'scoped memory for tpu_custom_call.1']
    #allocation5 [shape = 'u8[8192]{0}', space=vmem, size = 0x2000, scoped, tag = 'input window, operand 1, single buffered']
    #allocation6 [shape = 's32[1]{0}', space=sflag, size = 0x4, scoped, tag = 'scoped memory for tpu_custom_call.1']
    #allocation7 [shape = 'u8[8192]{0}', space=vmem, size = 0x2000, scoped, tag = 'output window, operand 0, single buffered']
    %8 = vsyncpa [#allocation3], 0
    %9 = vsyncpa [#allocation6], 0
    %10 = vsyncpa [#allocation4], 0
    // Predicated region
    $region2: #{tpu_custom_call.1} parent=1 // pred_check
      _
    $region3: #{tpu_custom_call.1} parent=1 // pred_check_branch
      %12 = sbr.rel (0) target = $region5
    $region4: #{tpu_custom_call.1} parent=1 // pred_region
      %s14 = ssub.s32 256, 256
      %15 = vsyncadd [#allocation3], %s14
      %s16 = sshll.u32 [#allocation2], 4
      %s17 = int_to_ptr.vmem [resolvable:$true] %s16
      %22 = dma.hbm_to_vmem [thread:$0]  %s0, 256, %s17, [#allocation3], 128, 128, 8
    $region5: #{tpu_custom_call.1} parent=1 // pred_fallthru
      _
    // Predicated region
    $region6: #{tpu_custom_call.1} parent=1 // pred_check
      _
    $region7: #{tpu_custom_call.1} parent=1 // pred_check_branch
      %24 = sbr.rel (0) target = $region9
    $region8: #{tpu_custom_call.1} parent=1 // pred_region
      %s26 = ssub.s32 256, 256
      %27 = vsyncadd [#allocation6], %s26
      %s28 = sshll.u32 [#allocation5], 4
      %s29 = int_to_ptr.vmem [resolvable:$true] %s28
      %34 = dma.hbm_to_vmem [thread:$0]  %s1, 256, %s29, [#allocation6], 64, 64, 4
    $region9: #{tpu_custom_call.1} parent=1 // pred_fallthru
      _
    // Predicated region
    $region10: #{tpu_custom_call.1} parent=1 // pred_check
      _
    $region11: #{tpu_custom_call.1} parent=1 // pred_check_branch
      %36 = sbr.rel (0) target = $region13
    $region12: #{tpu_custom_call.1} parent=1 // pred_region
      _
    $region13: #{tpu_custom_call.1} parent=1 // pred_fallthru
      _
    // Predicated region
    $region14: #{tpu_custom_call.1} parent=1 // pred_check
      _
    $region15: #{tpu_custom_call.1} parent=1 // pred_check_branch
      %38 = sbr.rel (0) target = $region17
    $region16: #{tpu_custom_call.1} parent=1 // pred_region
      %39 = dma.done [#allocation3], 256
    $region17: #{tpu_custom_call.1} parent=1 // pred_fallthru
      _
    // Predicated region
    $region18: #{tpu_custom_call.1} parent=1 // pred_check
      _
    $region19: #{tpu_custom_call.1} parent=1 // pred_check_branch
      %41 = sbr.rel (0) target = $region21
    $region20: #{tpu_custom_call.1} parent=1 // pred_region
      %42 = dma.done [#allocation6], 256
    $region21: #{tpu_custom_call.1} parent=1 // pred_fallthru
      _
    %v44 = vld [vmem:[#allocation2] sm:$0xff]
    %v45 = vld [vmem:[#allocation2 + $0x8] sm:$0xff]
    %vm46 = vcmask 261120
    %v47 = vsel %vm46, %v44, 0.0
    %48 = vadd.xlane.f32.xlu0 %v47
    %v49 = vpop.xlane.xlu0 %48
    %v50 = vsel %vm46, %v45, 0.0
    %51 = vadd.xlane.f32.xlu0 %v50
    %v52 = vpop.xlane.xlu0 %51
    %v53 = vrcp.pop 32.0
    %v54 = vmul.f32 %v49, %v53
    %v55 = vmul.f32 %v52, %v53
    %v56 = vsub.f32 %v44, %v54
    %v57 = vsub.f32 %v45, %v55
    %v58 = vmul.f32 %v56, %v56
    %v59 = vmul.f32 %v57, %v57
    %v60 = vsel %vm46, %v58, 0.0
    %61 = vadd.xlane.f32.xlu0 %v60
    %v62 = vpop.xlane.xlu0 %61
    %v63 = vsel %vm46, %v59, 0.0
    %64 = vadd.xlane.f32.xlu0 %v63
    %v65 = vpop.xlane.xlu0 %64
    %v66 = vmul.f32 %v62, 0.032258064
    %v67 = vmul.f32 %v65, 0.032258064
    %v68 = vrsqrt.pop %v66
    %v69 = vmul.f32 %v66, %v68
    %vm70 = vcmp.eq.f32.partialorder %v66, inf
    %v71 = vsel %vm70, %v66, %v69
    %vm72 = vcmp.eq.f32.partialorder %v66, 0.0
    %v73 = vand.u32 %v66, 2147483648
    %v74 = vsel %vm72, %v73, %v71
    %v75 = vrsqrt.pop %v67
    %v76 = vmul.f32 %v67, %v75
    %vm77 = vcmp.eq.f32.partialorder %v67, inf
    %v78 = vsel %vm77, %v67, %v76
    %vm79 = vcmp.eq.f32.partialorder %v67, 0.0
    %v80 = vand.u32 %v67, 2147483648
    %v81 = vsel %vm79, %v80, %v78
    %v82 = vadd.f32 %v74, 1e-06
    %v83 = vadd.f32 %v81, 1e-06
    %v84 = vrcp.pop %v82
    %v85 = vmul.f32 1.0, %v84
    %v86 = vrcp.pop %v83
    %v87 = vmul.f32 1.0, %v86
    %v88 = vmul.f32 %v56, %v85
    %v89 = vmul.f32 %v57, %v87
    %v90 = vpack.c.bf16 %v89, %v88
    %v91 = vld [vmem:[#allocation5] sm:$0xf]
    %v92 = vld [vmem:[#allocation5 + $0x4] sm:$0xf]
    %v93 = vld [vmem:[#allocation5 + $0x8] sm:$0xf]
    %v94 = vld [vmem:[#allocation5 + $0xc] sm:$0xf]
    %v99 = vunpack.c.l.b16 %v91
    %v100 = vunpack.c.l.b16 %v92
    %v101 = vunpack.c.l.b16 %v93
    %v102 = vunpack.c.l.b16 %v94
    %v103 = vpack.c.b16 %v100, %v99
    %v104 = vpack.c.b16 %v102, %v101
    %v108 = vsel %vm46, %v90, 0
    %110 = vmatprep.subr.bf16.mxu0 0
    %111 = vmatpush1.bf16.msra.mxu0 %v103
    %112 = vmatprep.subr.bf16.mxu0 0
    %113 = vmatpush1.bf16.msra.mxu0 %v104
    %114 = vmatprep.subr.bf16.mxu0 0
    %115 = vmatpush1.bf16.msra.mxu0 0
    %116 = vmatprep.subr.bf16.mxu0 0
    %117 = vmatpush1.bf16.msra.mxu0 0
    %118 = vmatprep.subr.bf16.mxu0 0
    %119 = vmatpush1.bf16.msra.mxu0 0
    %120 = vmatprep.subr.bf16.mxu0 0
    %121 = vmatpush1.bf16.msra.mxu0 0
    %122 = vmatprep.subr.bf16.mxu0 0
    %123 = vmatpush1.bf16.msra.mxu0 0
    %124 = vmatprep.subr.bf16.mxu0 0
    %125 = vmatpush1.bf16.msra.mxu0 0
    %126 = vmatprep.subr.bf16.mxu0 0
    %127 = vmatpush1.bf16.msra.mxu0 0
    %128 = vmatprep.subr.bf16.mxu0 0
    %129 = vmatpush1.bf16.msra.mxu0 0
    %130 = vmatprep.subr.bf16.mxu0 0
    %131 = vmatpush1.bf16.msra.mxu0 0
    %132 = vmatprep.subr.bf16.mxu0 0
    %133 = vmatpush1.bf16.msra.mxu0 0
    %134 = vmatprep.subr.bf16.mxu0 0
    %135 = vmatpush1.bf16.msra.mxu0 0
    %136 = vmatprep.subr.bf16.mxu0 0
    %137 = vmatpush1.bf16.msra.mxu0 0
    %138 = vmatprep.subr.bf16.mxu0 0
    %139 = vmatpush1.bf16.msra.mxu0 0
    %140 = vmatprep.subr.bf16.mxu0 0
    %141 = vmatpush1.bf16.msra.mxu0 0
    %142 = vmatprep.mubr.bf16.mxu0 0
    %143 = vmatmul.mubr.bf16.gmra.mrb[0].mxu0 %v108
    %v144 = vpop.f32.mrb[0].mxu0
    %v145 = vadd.f32 0.0, %v144
    %v146 = vpop.f32.mrb[0].mxu0
    %v147 = vpop.f32.mrb[0].mxu0
    %v148 = vadd.f32 0.0, %v147
    %v149 = vpop.f32.mrb[0].mxu0
    %150 = vdwg.mxu0
    %v151 = vadd.f32 %v44, %v145
    %v152 = vadd.f32 %v45, %v148
    %v153 = vld [vmem:[%s2] sm:$0x1]
    %v155 = vlaneseq
    %v156 = vshrl.u32 %v155, 7
    %v157 = vsub.s32 0, %v156
    %v158 = vrot.slane %v153, %v157
    %v160 = vadd.f32 %v151, %v158
    %v161 = vadd.f32 %v152, %v158
    %162 = vst.msk [vmem:[#allocation7] sm:$0xff] %vm46, %v160
    %163 = vst.msk [vmem:[#allocation7 + $0x8] sm:$0xff] %vm46, %v161
    // Predicated region
    $region22: #{tpu_custom_call.1} parent=1 // pred_check
      _
    $region23: #{tpu_custom_call.1} parent=1 // pred_check_branch
      %165 = sbr.rel (0) target = $region25
    $region24: #{tpu_custom_call.1} parent=1 // pred_region
      %s167 = ssub.s32 256, 256
      %168 = vsyncadd [#allocation4], %s167
      %s169 = sshll.u32 [#allocation7], 4
      %s170 = int_to_ptr.vmem [resolvable:$true] %s169
      %175 = dma.vmem_to_hbm [thread:$0]  %s170, 256, %s3, [#allocation4], 128, 128, 8
    $region25: #{tpu_custom_call.1} parent=1 // pred_fallthru
      _
    // Predicated region
    $region26: #{tpu_custom_call.1} parent=1 // pred_check
      _
    $region27: #{tpu_custom_call.1} parent=1 // pred_check_branch
      %177 = sbr.rel (0) target = $region29
    $region28: #{tpu_custom_call.1} parent=1 // pred_region
      %178 = dma.done [#allocation4], 256
    $region29: #{tpu_custom_call.1} parent=1 // pred_fallthru
      _
    %179 = vsyncpa [#allocation3], 1
    %180 = vsyncpa [#allocation6], 1
    %181 = vsyncpa [#allocation4], 1

</llo_original>
